<compile_context>
chip_gen: v5e
topology: v5e:2x2
jax: 0.10.0
libtpu: 0.0.40
codegen_flags: <defaults>
</compile_context>

<pallas_src>
import functools

import jax
import jax.numpy as jnp
from jax.experimental import pallas as pl
from jax.experimental.pallas import tpu as pltpu


def _round_up(x, m):
    return ((x + m - 1) // m) * m


# ---------------------------------------------------------------------------
# SmoothnessLoss kernel:  coeff * clamp(||emb - tgt||_2 - margin, 0)  per sample
# Layout: emb/tgt are (D, TN) lane-dense blocks, coeff is (1, TN).
# ---------------------------------------------------------------------------
def _smoothness_kernel(emb_ref, tgt_ref, coef_ref, out_ref, *, margin):
    diff = emb_ref[...].astype(jnp.float32) - tgt_ref[...].astype(jnp.float32)  # (D, TN)
    sq = jnp.sum(diff * diff, axis=0, keepdims=True)                            # (1, TN)
    nrm = jnp.sqrt(sq)
    if margin != 0.0:                       # norm >= 0, so clamp is a no-op when margin == 0
        nrm = jnp.maximum(nrm - margin, 0.0)
    out_ref[...] = coef_ref[...].astype(jnp.float32) * nrm


def smoothness_loss(embedding, target, coefficient, margin=0.0, *, block_cols=8192):
    n, d = embedding.shape
    assert target.shape == (n, d)
    assert coefficient.shape == (n,)

    tn = _round_up(min(block_cols, _round_up(n, 128)), 128)
    pad_n = _round_up(n, tn)
    pad = pad_n - n

    emb_t = jnp.pad(embedding.astype(jnp.float32).T, ((0, 0), (0, pad)))
    tgt_t = jnp.pad(target.astype(jnp.float32).T, ((0, 0), (0, pad)))
    coef = jnp.pad(coefficient.astype(jnp.float32)[None, :], ((0, 0), (0, pad)))

    kernel = functools.partial(_smoothness_kernel, margin=float(margin))
    partial_out = pl.pallas_call(
        kernel,
        out_shape=jax.ShapeDtypeStruct((1, pad_n), jnp.float32),
        grid_spec=pltpu.PrefetchScalarGridSpec(
            num_scalar_prefetch=0,
            grid=(pad_n // tn,),
            in_specs=[
                pl.BlockSpec((d, tn), lambda i: (0, i)),
                pl.BlockSpec((d, tn), lambda i: (0, i)),
                pl.BlockSpec((1, tn), lambda i: (0, i)),
            ],
            out_specs=pl.BlockSpec((1, tn), lambda i: (0, i)),
        ),
        compiler_params=pltpu.CompilerParams(dimension_semantics=("parallel",)),
    )(emb_t, tgt_t, coef)

    return jnp.sum(partial_out) / jnp.float32(n)


# ---------------------------------------------------------------------------
# UmapLoss kernel: per-pair UMAP cross-entropy.
# Layout: all_to/all_from are (D, TM) lane-dense blocks, p_graph is (1, TM).
# ---------------------------------------------------------------------------
def _umap_ce_kernel(to_ref, frm_ref, pg_ref, out_ref, *, a, b, repulsion, eps):
    diff = to_ref[...].astype(jnp.float32) - frm_ref[...].astype(jnp.float32)   # (D, TM)
    sq = jnp.sum(diff * diff, axis=0, keepdims=True)                            # (1, TM)
    if b == 1.0:
        dpow = sq                                   # d^(2b) == d^2 == sq, avoids sqrt+pow
    else:
        dpow = jnp.power(sq, jnp.float32(b))
    p_dist = 1.0 / (1.0 + a * dpow)
    pg = pg_ref[...].astype(jnp.float32)
    att = -pg * jnp.log(jnp.clip(p_dist, eps, 1.0))
    rep = -(1.0 - pg) * jnp.log(jnp.clip(1.0 - p_dist, eps, 1.0)) * repulsion
    out_ref[...] = att + rep


def umap_loss(embedding_to, embedding_from, rng_key, *, negative_sample_rate=5,
              a=1.0, b=1.0, repulsion_strength=1.0, eps=1e-4, block_cols=8192):
    bsz, d = embedding_to.shape
    nsr = int(negative_sample_rate)

    # Negative sampling (wrapper-side: repeat_interleave + random permutation gather).
    neg_to = jnp.repeat(embedding_to, nsr, axis=0)
    rep_neg = jnp.repeat(embedding_from, nsr, axis=0)
    perm = jax.random.permutation(rng_key, bsz * nsr)
    neg_from = rep_neg[perm]

    all_to = jnp.concatenate([embedding_to, neg_to], axis=0)
    all_from = jnp.concatenate([embedding_from, neg_from], axis=0)
    p_graph = jnp.concatenate(
        [jnp.ones((bsz,), jnp.float32), jnp.zeros((bsz * nsr,), jnp.float32)])
    m = bsz * (1 + nsr)

    tm = _round_up(min(block_cols, _round_up(m, 128)), 128)
    pad_m = _round_up(m, tm)
    pad = pad_m - m

    to_t = jnp.pad(all_to.astype(jnp.float32).T, ((0, 0), (0, pad)))
    frm_t = jnp.pad(all_from.astype(jnp.float32).T, ((0, 0), (0, pad)))
    # Pad p_graph with 1.0: padded pairs have distance 0 -> p_dist 1 -> CE exactly 0.
    pg = jnp.pad(p_graph[None, :], ((0, 0), (0, pad)), constant_values=1.0)

    kernel = functools.partial(_umap_ce_kernel, a=float(a), b=float(b),
                               repulsion=float(repulsion_strength), eps=float(eps))
    ce = pl.pallas_call(
        kernel,
        out_shape=jax.ShapeDtypeStruct((1, pad_m), jnp.float32),
        grid_spec=pltpu.PrefetchScalarGridSpec(
            num_scalar_prefetch=0,
            grid=(pad_m // tm,),
            in_specs=[
                pl.BlockSpec((d, tm), lambda i: (0, i)),
                pl.BlockSpec((d, tm), lambda i: (0, i)),
                pl.BlockSpec((1, tm), lambda i: (0, i)),
            ],
            out_specs=pl.BlockSpec((1, tm), lambda i: (0, i)),
        ),
        compiler_params=pltpu.CompilerParams(dimension_semantics=("parallel",)),
    )(to_t, frm_t, pg)

    return jnp.sum(ce) / jnp.float32(m)


# ---------------------------------------------------------------------------
# ReconstructionLoss kernel: per-row sum of (1+a)^beta * (edge - recon)^2.
# Layout: (TR, Dd) row blocks (Dd already lane-dense); per-row sums out as (TR, 1).
# ---------------------------------------------------------------------------
def _recon_kernel(edge_ref, recon_ref, a_ref, out_ref, *, beta):
    diff = edge_ref[...].astype(jnp.float32) - recon_ref[...].astype(jnp.float32)  # (TR, Dd)
    w = 1.0 + a_ref[...].astype(jnp.float32)
    if beta != 1.0:
        w = jnp.power(w, jnp.float32(beta))
    term = w * diff * diff
    out_ref[...] = jnp.sum(term, axis=1, keepdims=True)                            # (TR, 1)


def recon_loss(edge_to, edge_from, recon_to, recon_from, a_to, a_from, *,
               beta=1.0, block_rows=256):
    n, dd = edge_to.shape
    edge = jnp.concatenate([edge_to, edge_from], axis=0).astype(jnp.float32)
    recon = jnp.concatenate([recon_to, recon_from], axis=0).astype(jnp.float32)
    att = jnp.concatenate([a_to, a_from], axis=0).astype(jnp.float32)

    rows = 2 * n
    tr = _round_up(min(block_rows, _round_up(rows, 8)), 8)
    pad_rows = _round_up(rows, tr)
    pad = pad_rows - rows
    edge = jnp.pad(edge, ((0, pad), (0, 0)))
    recon = jnp.pad(recon, ((0, pad), (0, 0)))
    att = jnp.pad(att, ((0, pad), (0, 0)))

    kernel = functools.partial(_recon_kernel, beta=float(beta))
    row_sums = pl.pallas_call(
        kernel,
        out_shape=jax.ShapeDtypeStruct((pad_rows, 1), jnp.float32),
        grid_spec=pltpu.PrefetchScalarGridSpec(
            num_scalar_prefetch=0,
            grid=(pad_rows // tr,),
            in_specs=[
                pl.BlockSpec((tr, dd), lambda i: (i, 0)),
                pl.BlockSpec((tr, dd), lambda i: (i, 0)),
                pl.BlockSpec((tr, dd), lambda i: (i, 0)),
            ],
            out_specs=pl.BlockSpec((tr, 1), lambda i: (i, 0)),
        ),
        compiler_params=pltpu.CompilerParams(dimension_semantics=("parallel",)),
    )(edge, recon, att)

    # (loss_to + loss_from) / 2, with each loss = sum / (n * dd)
    return jnp.sum(row_sums) / jnp.float32(2 * n * dd)


# ---------------------------------------------------------------------------
# HybridLoss.forward
# ---------------------------------------------------------------------------
def hybrid_loss(edge_to, edge_from, a_to, a_from, embeded_to, coeff, outputs, rng_key,
                *, lambd1, lambd2, negative_sample_rate=5, umap_a=1.0, umap_b=1.0,
                repulsion_strength=1.0, beta=1.0, margin=0.0):
    embedding_to, embedding_from = outputs['umap']
    recon_to, recon_from = outputs['recon']
    recon_l = recon_loss(edge_to, edge_from, recon_to, recon_from, a_to, a_from, beta=beta)
    umap_l = umap_loss(embedding_to, embedding_from, rng_key,
                       negative_sample_rate=negative_sample_rate, a=umap_a, b=umap_b,
                       repulsion_strength=repulsion_strength)
    smooth_l = smoothness_loss(embedding_to, embeded_to, coeff, margin=margin)
    loss = umap_l + lambd1 * recon_l + lambd2 * smooth_l
    return umap_l, recon_l, smooth_l, loss


# ---------------------------------------------------------------------------
# Pure-JAX references
# ---------------------------------------------------------------------------
def _smooth_ref(embedding, target, coeff, margin=0.0):
    nrm = jnp.linalg.norm(embedding - target, axis=1)
    return jnp.mean(coeff * jnp.maximum(nrm - margin, 0.0))


def _recon_ref(edge_to, edge_from, recon_to, recon_from, a_to, a_from, beta=1.0):
    l1 = jnp.mean(jnp.mean(jnp.power(1.0 + a_to, beta) * jnp.square(edge_to - recon_to), axis=1))
    l2 = jnp.mean(jnp.mean(jnp.power(1.0 + a_from, beta) * jnp.square(edge_from - recon_from), axis=1))
    return (l1 + l2) / 2.0


def _umap_ref(emb_to, emb_from, rng_key, nsr, a=1.0, b=1.0, repulsion=1.0, eps=1e-4):
    bsz = emb_to.shape[0]
    neg_to = jnp.repeat(emb_to, nsr, axis=0)
    rep_neg = jnp.repeat(emb_from, nsr, axis=0)
    perm = jax.random.permutation(rng_key, bsz * nsr)
    neg_from = rep_neg[perm]
    d = jnp.concatenate([jnp.linalg.norm(emb_to - emb_from, axis=1),
                         jnp.linalg.norm(neg_to - neg_from, axis=1)])
    p_dist = 1.0 / (1.0 + a * d ** (2.0 * b))
    p_graph = jnp.concatenate([jnp.ones((bsz,)), jnp.zeros((bsz * nsr,))])
    att = -p_graph * jnp.log(jnp.clip(p_dist, eps, 1.0))
    rep = -(1.0 - p_graph) * jnp.log(jnp.clip(1.0 - p_dist, eps, 1.0)) * repulsion
    return jnp.mean(att + rep)


if __name__ == "__main__":
    key = jax.random.PRNGKey(0)
    ks = jax.random.split(key, 10)

    B = 8          # edge batch size
    D_DATA = 32    # high-dim data dimension
    D_EMB = 2      # low-dim visualization embedding dimension
    NSR = 5
    LAMBD1, LAMBD2 = 1.0, 0.3
    MARGIN, BETA = 0.0, 1.0

    edge_to = jax.random.normal(ks[0], (B, D_DATA), jnp.float32)
    edge_from = jax.random.normal(ks[1], (B, D_DATA), jnp.float32)
    a_to = jax.random.uniform(ks[2], (B, D_DATA), jnp.float32)
    a_from = jax.random.uniform(ks[3], (B, D_DATA), jnp.float32)
    embeded_to = jax.random.normal(ks[4], (B, D_EMB), jnp.float32)
    coeff = jax.random.uniform(ks[5], (B,), jnp.float32)
    outputs = {
        'umap': (jax.random.normal(ks[6], (B, D_EMB), jnp.float32),
                 jax.random.normal(ks[7], (B, D_EMB), jnp.float32)),
        'recon': (jax.random.normal(ks[8], (B, D_DATA), jnp.float32),
                  jax.random.normal(ks[9], (B, D_DATA), jnp.float32)),
    }
    neg_key = jax.random.PRNGKey(123)

    umap_l, recon_l, smooth_l, loss = hybrid_loss(
        edge_to, edge_from, a_to, a_from, embeded_to, coeff, outputs, neg_key,
        lambd1=LAMBD1, lambd2=LAMBD2, negative_sample_rate=NSR,
        margin=MARGIN, beta=BETA)
    loss = jax.block_until_ready(loss)

    # References
    smooth_ref = _smooth_ref(outputs['umap'][0], embeded_to, coeff, MARGIN)
    recon_ref = _recon_ref(edge_to, edge_from, outputs['recon'][0], outputs['recon'][1],
                           a_to, a_from, BETA)
    umap_ref = _umap_ref(outputs['umap'][0], outputs['umap'][1], neg_key, NSR)
    loss_ref = umap_ref + LAMBD1 * recon_ref + LAMBD2 * smooth_ref

    assert jnp.allclose(smooth_l, smooth_ref, atol=1e-5, rtol=1e-5), (smooth_l, smooth_ref)
    assert jnp.allclose(recon_l, recon_ref, atol=1e-5, rtol=1e-5), (recon_l, recon_ref)
    assert jnp.allclose(umap_l, umap_ref, atol=1e-5, rtol=1e-5), (umap_l, umap_ref)
    assert jnp.allclose(loss, loss_ref, atol=1e-5, rtol=1e-5), (loss, loss_ref)

    print("KERNEL_OK")
</pallas_src>

<mosaic_0001>
module attributes {stable_mosaic.version = 11 : i64} {
  func.func @_recon_kernel(%arg0: i32, %arg1: memref<16x32xf32, #tpu.memory_space<vmem>>, %arg2: memref<16x32xf32, #tpu.memory_space<vmem>>, %arg3: memref<16x32xf32, #tpu.memory_space<vmem>>, %arg4: memref<16x1xf32, #tpu.memory_space<vmem>>) attributes {dimension_semantics = [#tpu.dimension_semantics<parallel>], iteration_bounds = array<i64: 1>, scalar_prefetch = 0 : i64, scratch_operands = 0 : i64, tpu.core_type = #tpu.core_type<tc>, window_params = [{transform_indices = @transform_0, window_bounds = array<i64: 16, 32>}, {transform_indices = @transform_1, window_bounds = array<i64: 16, 32>}, {transform_indices = @transform_2, window_bounds = array<i64: 16, 32>}, {transform_indices = @transform_3, window_bounds = array<i64: 16, 1>}]} {
    %c0 = arith.constant 0 : index
    %c0_0 = arith.constant 0 : index
    %0 = vector.load %arg1[%c0, %c0_0] : memref<16x32xf32, #tpu.memory_space<vmem>>, vector<16x32xf32>
    %c0_1 = arith.constant 0 : index
    %c0_2 = arith.constant 0 : index
    %1 = vector.load %arg2[%c0_1, %c0_2] : memref<16x32xf32, #tpu.memory_space<vmem>>, vector<16x32xf32>
    %2 = arith.subf %0, %1 : vector<16x32xf32>
    %c0_3 = arith.constant 0 : index
    %c0_4 = arith.constant 0 : index
    %3 = vector.load %arg3[%c0_3, %c0_4] : memref<16x32xf32, #tpu.memory_space<vmem>>, vector<16x32xf32>
    %cst = arith.constant 1.000000e+00 : f32
    %4 = vector.broadcast %cst : f32 to vector<16x32xf32>
    %5 = arith.addf %4, %3 : vector<16x32xf32>
    %6 = arith.mulf %5, %2 : vector<16x32xf32>
    %7 = arith.mulf %6, %2 : vector<16x32xf32>
    %cst_5 = arith.constant dense<0.000000e+00> : vector<16xf32>
    %8 = vector.multi_reduction <add>, %7, %cst_5 [1] : vector<16x32xf32> to vector<16xf32>
    %9 = vector.shape_cast %8 : vector<16xf32> to vector<16x1xf32>
    %c0_6 = arith.constant 0 : index
    %c0_7 = arith.constant 0 : index
    %10 = vector.load %arg4[%c0_6, %c0_7] : memref<16x1xf32, #tpu.memory_space<vmem>>, vector<16x1xf32>
    tpu.vector_store %arg4[%c0_6, %c0_7], %9 {strides = array<i32>} : memref<16x1xf32, #tpu.memory_space<vmem>>, vector<16x1xf32>,
    return
  }
  func.func @transform_0(%arg0: i32) -> (i32, i32) {
    %c0_i32 = arith.constant 0 : i32
    %c0_i32_0 = arith.constant 0 : i32
    return %arg0, %c0_i32 : i32, i32
  }
  func.func @transform_1(%arg0: i32) -> (i32, i32) {
    %c0_i32 = arith.constant 0 : i32
    %c0_i32_0 = arith.constant 0 : i32
    return %arg0, %c0_i32 : i32, i32
  }
  func.func @transform_2(%arg0: i32) -> (i32, i32) {
    %c0_i32 = arith.constant 0 : i32
    %c0_i32_0 = arith.constant 0 : i32
    return %arg0, %c0_i32 : i32, i32
  }
  func.func @transform_3(%arg0: i32) -> (i32, i32) {
    %c0_i32 = arith.constant 0 : i32
    %c0_i32_0 = arith.constant 0 : i32
    return %arg0, %c0_i32 : i32, i32
  }
}

</mosaic_0001>

<llo_original>
// kernel: tpu_custom_call.1
$region0: #{tpu_custom_call.1}
  #allocation0 [shape = 'u32[]', space=smem, size = 0x4, offset = 0x4, fixed_abs, tag = 'smem constant byte address 0x4 - core index']
  #allocation1 [shape = 'u32[72,128]{1,0:T(1,128)}', space=vmem, size = 0x9000, scoped, tag = 'internal scratch']
  %s0 = inlined_call_operand.hbm [shape: f32[16,32], index: 0, kind: input, shape index: {}]
  %s1 = inlined_call_operand.hbm [shape: f32[16,32], index: 1, kind: input, shape index: {}]
  %s2 = inlined_call_operand.hbm [shape: f32[16,32], index: 2, kind: input, shape index: {}]
  %s3 = inlined_call_operand.vmem [shape: f32[16,1], index: 3, kind: output, shape index: {}]
  %s4 = sld [smem:[#allocation0]]
  $region34: #{tpu_custom_call.1} parent=0
    _
  %s6 = ssub.s32 1, %s4
  %s7 = scalar_select 0, %s6, %s4
  $region1: #{tpu_custom_call.1} parent=0
    #allocation2 [shape = 'u8[8192]{0}', space=vmem, size = 0x2000, scoped, tag = 'input window, operand 0, single buffered']
    #allocation3 [shape = 's32[1]{0}', space=sflag, size = 0x4, scoped, tag = 'scoped memory for tpu_custom_call.1']
    #allocation4 [shape = 'u8[8192]{0}', space=vmem, size = 0x2000, scoped, tag = 'input window, operand 1, single buffered']
    #allocation5 [shape = 's32[1]{0}', space=sflag, size = 0x4, scoped, tag = 'scoped memory for tpu_custom_call.1']
    #allocation6 [shape = 'u8[8192]{0}', space=vmem, size = 0x2000, scoped, tag = 'input window, operand 2, single buffered']
    %8 = vsyncpa [#allocation3], 0
    %9 = vsyncpa [#allocation5], 0
    // Predicated region
    $region2: #{tpu_custom_call.1} parent=1 // pred_check
      _
    $region3: #{tpu_custom_call.1} parent=1 // pred_check_branch
      %11 = sbr.rel (0) target = $region5
    $region4: #{tpu_custom_call.1} parent=1 // pred_region
      %13 = vsyncadd [#allocation3], 0
      %s14 = sshll.u32 %s0, 4
      %s15 = int_to_ptr.hbm [resolvable:$true] %s14
      %s16 = sshll.u32 [#allocation2], 4
      %s17 = int_to_ptr.vmem [resolvable:$true] %s16
      %22 = dma.hbm_to_vmem [thread:$0]  %s15, 256, %s17, [#allocation3], 128, 128, 8
    $region5: #{tpu_custom_call.1} parent=1 // pred_fallthru
      _
    // Predicated region
    $region6: #{tpu_custom_call.1} parent=1 // pred_check
      _
    $region7: #{tpu_custom_call.1} parent=1 // pred_check_branch
      %24 = sbr.rel (0) target = $region9
    $region8: #{tpu_custom_call.1} parent=1 // pred_region
      %26 = vsyncadd [#allocation5], 0
      %s27 = sshll.u32 %s1, 4
      %s28 = int_to_ptr.hbm [resolvable:$true] %s27
      %s29 = sshll.u32 [#allocation4], 4
      %s30 = int_to_ptr.vmem [resolvable:$true] %s29
      %35 = dma.hbm_to_vmem [thread:$0]  %s28, 256, %s30, [#allocation5], 128, 128, 8
    $region9: #{tpu_custom_call.1} parent=1 // pred_fallthru
      _
    // Predicated region
    $region10: #{tpu_custom_call.1} parent=1 // pred_check
      _
    $region11: #{tpu_custom_call.1} parent=1 // pred_check_branch
      %37 = sbr.rel (0) target = $region13
    $region12: #{tpu_custom_call.1} parent=1 // pred_region
      %39 = vsyncadd [#allocation5], 0
      %s40 = sshll.u32 %s2, 4
      %s41 = int_to_ptr.hbm [resolvable:$true] %s40
      %s42 = sshll.u32 [#allocation6], 4
      %s43 = int_to_ptr.vmem [resolvable:$true] %s42
      %48 = dma.hbm_to_vmem [thread:$0]  %s41, 256, %s43, [#allocation5], 128, 128, 8
    $region13: #{tpu_custom_call.1} parent=1 // pred_fallthru
      _
    // Predicated region
    $region14: #{tpu_custom_call.1} parent=1 // pred_check
      _
    $region15: #{tpu_custom_call.1} parent=1 // pred_check_branch
      %50 = sbr.rel (0) target = $region17
    $region16: #{tpu_custom_call.1} parent=1 // pred_region
      %52 = dma.done [#allocation3], 256
    $region17: #{tpu_custom_call.1} parent=1 // pred_fallthru
      _
    // Predicated region
    $region18: #{tpu_custom_call.1} parent=1 // pred_check
      _
    $region19: #{tpu_custom_call.1} parent=1 // pred_check_branch
      %54 = sbr.rel (0) target = $region21
    $region20: #{tpu_custom_call.1} parent=1 // pred_region
      %56 = dma.done [#allocation5], 256
    $region21: #{tpu_custom_call.1} parent=1 // pred_fallthru
      _
    // Predicated region
    $region22: #{tpu_custom_call.1} parent=1 // pred_check
      _
    $region23: #{tpu_custom_call.1} parent=1 // pred_check_branch
      %58 = sbr.rel (0) target = $region25
    $region24: #{tpu_custom_call.1} parent=1 // pred_region
      %60 = dma.done [#allocation5], 256
    $region25: #{tpu_custom_call.1} parent=1 // pred_fallthru
      _
    %v61 = vld [vmem:[#allocation2] sm:$0xff]
    %v62 = vld [vmem:[#allocation2 + $0x8] sm:$0xff]
    %v63 = vld [vmem:[#allocation4] sm:$0xff]
    %v64 = vld [vmem:[#allocation4 + $0x8] sm:$0xff]
    %v65 = vsub.f32 %v61, %v63
    %v66 = vsub.f32 %v62, %v64
    %v67 = vld [vmem:[#allocation6] sm:$0xff]
    %v68 = vld [vmem:[#allocation6 + $0x8] sm:$0xff]
    %v69 = vadd.f32 %v67, 1.0
    %v70 = vadd.f32 %v68, 1.0
    %v71 = vmul.f32 %v69, %v65
    %v72 = vmul.f32 %v70, %v66
    %v73 = vmul.f32 %v71, %v65
    %v74 = vmul.f32 %v72, %v66
    %vm75 = vcmask 261120
    %v76 = vsel %vm75, %v73, 0.0
    %77 = vadd.xlane.f32.xlu0 %v76
    %v78 = vpop.xlane.xlu0 %77
    %v79 = vsel %vm75, %v74, 0.0
    %80 = vadd.xlane.f32.xlu0 %v79
    %v81 = vpop.xlane.xlu0 %80
    %vm82 = vcmask 7168
    %83 = vst.msk [vmem:[%s3] sm:$0xff] %vm82, %v78
    %84 = vst.msk [vmem:[%s3 + $0x8] sm:$0xff] %vm82, %v81
    // Predicated region
    $region26: #{tpu_custom_call.1} parent=1 // pred_check
      _
    $region27: #{tpu_custom_call.1} parent=1 // pred_check_branch
      %86 = sbr.rel (0) target = $region29
    $region28: #{tpu_custom_call.1} parent=1 // pred_region
      _
    $region29: #{tpu_custom_call.1} parent=1 // pred_fallthru
      _
    // Predicated region
    $region30: #{tpu_custom_call.1} parent=1 // pred_check
      _
    $region31: #{tpu_custom_call.1} parent=1 // pred_check_branch
      %88 = sbr.rel (0) target = $region33
    $region32: #{tpu_custom_call.1} parent=1 // pred_region
      _
    $region33: #{tpu_custom_call.1} parent=1 // pred_fallthru
      _
    %89 = vsyncpa [#allocation3], 1
    %90 = vsyncpa [#allocation5], 1

</llo_original>
